<compile_context>
chip_gen: v6e
topology: v6e:2x2x1
jax: 0.10.0
libtpu: 0.0.40
codegen_flags: <defaults>
</compile_context>

<pallas_src>
import functools

import jax
import jax.numpy as jnp
from jax.experimental import pallas as pl
from jax.experimental.pallas import tpu as pltpu


def image_prefix_kernel(x_ref, w_ref, consts_ref, o_ref, pooled_acc,
                        *, use_layernorm, eps):
    """Fused ImagePrefix kernel, gridded over HW tiles (reduction axis).

    x_ref      : (B, C, HW_tile)  streamed image tile (NCHW, spatial flattened)
    w_ref      : (C, SD)          fused (1/HW * enc-1x1conv o proj) weight, pre-transposed
    consts_ref : (SD+3, SD)       rows [0:SD]   = A  (block-averaging matrix for LN)
                                  row  SD       = fused bias
                                  row  SD+1     = LayerNorm gamma, tiled S times
                                  row  SD+2     = LayerNorm beta,  tiled S times
    o_ref      : (B, SD)          lane-dense output (wrapper reshapes to (B, S, D))
    pooled_acc : (B, C) f32       VMEM scratch: spatial-sum accumulator
    """
    k = pl.program_id(0)
    sd = consts_ref.shape[1]

    @pl.when(k == 0)
    def _():
        pooled_acc[...] = jnp.zeros_like(pooled_acc)

    # AdaptiveAvgPool2d((1,1)): spatial sum over this HW tile (the 1/HW factor is
    # folded into w_ref).  Accumulate in f32 even if x is streamed in bf16.
    pooled_acc[...] += jnp.sum(x_ref[...].astype(jnp.float32), axis=-1)

    @pl.when(k == pl.num_programs(0) - 1)
    def _():
        pooled = pooled_acc[...]                                      # (B, C) f32
        # Fused encoder 1x1-conv + proj Linear: one M=B GEMM, f32 accumulation.
        y = jnp.dot(pooled.astype(w_ref.dtype), w_ref[...],
                    preferred_element_type=jnp.float32)               # (B, SD)
        y = y + consts_ref[sd:sd + 1, :]                              # fused bias

        # self.dropout: nn.Dropout in eval mode is the identity.

        if use_layernorm:
            # Per-out_dim LayerNorm via one precomputed (SD, SD) block-averaging
            # matrix A: segmented mean / variance stay in the lane-dense (B, SD)
            # layout and ride the otherwise-idle MXU (no reshapes / relayouts).
            A = consts_ref[0:sd, :]                                   # (SD, SD)
            mu = jnp.dot(y, A, preferred_element_type=jnp.float32)    # (B, SD)
            c = y - mu
            var = jnp.dot(c * c, A, preferred_element_type=jnp.float32)
            y = (c * jax.lax.rsqrt(var + eps)
                 * consts_ref[sd + 1:sd + 2, :]                       # gamma (tiled)
                 + consts_ref[sd + 2:sd + 3, :])                      # beta  (tiled)

        o_ref[...] = y.astype(o_ref.dtype)


def prepare_image_prefix(params, *, out_dim, out_seq_len, image_hw,
                         compute_dtype=jnp.float32):
    """One-time parameter preprocessing, hoisted out of the per-forward path.

    Call once (outputs are plain device arrays) and reuse across forward calls.
      feat = pooled_mean @ wc.T + bc ;  y = feat @ wp.T + bp
      => y = pooled_sum @ ((wc.T @ wp.T) / HW) + (bc @ wp.T + bp)
    """
    wc, bc, wp, bp = params["wc"], params["bc"], params["wp"], params["bp"]
    E, C = wc.shape
    SD = out_dim * out_seq_len
    assert wp.shape == (SD, E)

    hi = jax.lax.Precision.HIGHEST
    wc32 = wc.astype(jnp.float32)
    wp32 = wp.astype(jnp.float32)
    w_fused = jnp.dot(wc32.T, wp32.T, precision=hi) / image_hw          # (C, SD)
    b_fused = jnp.dot(bc.astype(jnp.float32), wp32.T, precision=hi) \
        + bp.astype(jnp.float32)                                        # (1, SD)

    # LayerNorm params tiled to lane-align with the (B, SD) output row.
    gamma_t = jnp.tile(params["gamma"].astype(jnp.float32), (1, out_seq_len))  # (1, SD)
    beta_t = jnp.tile(params["beta"].astype(jnp.float32), (1, out_seq_len))    # (1, SD)

    # Block-averaging matrix: A[i, j] = 1/out_dim iff i, j lie in the same
    # out_dim-wide segment.  mu = y @ A gives the per-segment mean broadcast back.
    seg_ids = jnp.arange(SD, dtype=jnp.int32) // out_dim
    A = (seg_ids[:, None] == seg_ids[None, :]).astype(jnp.float32) / out_dim   # (SD, SD)

    # Pack all tiny constants into ONE array -> one DMA.  A occupies rows [0:SD]
    # (SD is a multiple of 8, so A stays sublane-aligned).
    consts = jnp.concatenate([A, b_fused, gamma_t, beta_t], axis=0)     # (SD+3, SD)

    return {
        "w_fused": w_fused.astype(compute_dtype),
        "consts": consts,
        "sd": SD,
        "out_dim": out_dim,
        "out_seq_len": out_seq_len,
    }


def image_prefix_forward(x, prepped, *, use_layernorm=True, eps=1e-5, hw_block=512):
    """x: (B, C, H, W) float32 (NCHW, same as the PyTorch module)."""
    B, C, H, W = x.shape
    HW = H * W
    w_fused, consts = prepped["w_fused"], prepped["consts"]
    SD = prepped["sd"]
    out_seq_len, out_dim = prepped["out_seq_len"], prepped["out_dim"]
    assert w_fused.shape == (C, SD)

    # HW tile: a multiple of 128 lanes that divides HW (fall back to whole extent).
    hw_block = min(hw_block, HW)
    if hw_block % 128 != 0 or HW % hw_block != 0:
        hw_block = HW
    n_hw = HW // hw_block

    x_flat = x.reshape(B, C, HW).astype(w_fused.dtype)   # glue: NCHW -> (B, C, H*W)

    kernel = functools.partial(image_prefix_kernel,
                               use_layernorm=use_layernorm, eps=eps)

    out_flat = pl.pallas_call(
        kernel,
        grid=(n_hw,),
        in_specs=[
            # Streamed image tiles (reduction over the HW grid axis).
            pl.BlockSpec((B, C, hw_block), lambda k: (0, 0, k)),
            # Grid-invariant blocks below are fetched once (constant index_map).
            pl.BlockSpec((C, SD), lambda k: (0, 0)),
            pl.BlockSpec((SD + 3, SD), lambda k: (0, 0)),
        ],
        # Lane-dense output (SD = 256 lanes): unmasked stores, written on last step.
        out_specs=pl.BlockSpec((B, SD), lambda k: (0, 0)),
        out_shape=jax.ShapeDtypeStruct((B, SD), jnp.float32),
        scratch_shapes=[pltpu.VMEM((B, C), jnp.float32)],
        compiler_params=pltpu.CompilerParams(dimension_semantics=("arbitrary",)),
    )(x_flat, w_fused, consts)

    # rearrange 'b (s d) -> b s d' : free row-major metadata reshape in the wrapper.
    return out_flat.reshape(B, out_seq_len, out_dim)


def image_prefix_reference(x, params, *, out_dim, out_seq_len,
                           use_layernorm=True, eps=1e-5):
    """Pure-JAX reference mirroring the PyTorch forward (un-fused two-layer path)."""
    hi = jax.lax.Precision.HIGHEST
    B = x.shape[0]
    pooled = jnp.mean(x, axis=(2, 3))                                   # AdaptiveAvgPool2d
    feat = jnp.dot(pooled, params["wc"].T, precision=hi) + params["bc"][0]
    proj = jnp.dot(feat, params["wp"].T, precision=hi) + params["bp"][0]
    y = proj.reshape(B, out_seq_len, out_dim)                           # 'b (s d) -> b s d'
    if use_layernorm:
        mu = y.mean(-1, keepdims=True)
        var = ((y - mu) ** 2).mean(-1, keepdims=True)
        y = (y - mu) / jnp.sqrt(var + eps) * params["gamma"][0] + params["beta"][0]
    return y


if __name__ == "__main__":
    # Small, forward-consistent shapes.
    B, C, H, W = 2, 4, 16, 16       # input image (NCHW)
    E = 32                          # stand-in encoder_out_dim
    out_seq_len = 8                 # config.image_seq_len
    out_dim = 32                    # projected hidden size (lm hidden)

    key = jax.random.PRNGKey(0)
    kx, kwc, kbc, kwp, kbp = jax.random.split(key, 5)

    x = jax.random.normal(kx, (B, C, H, W), dtype=jnp.float32)

    params = {
        "wc": 0.1 * jax.random.normal(kwc, (E, C), dtype=jnp.float32),
        "bc": 0.1 * jax.random.normal(kbc, (1, E), dtype=jnp.float32),
        "wp": 0.1 * jax.random.normal(kwp, (out_seq_len * out_dim, E), dtype=jnp.float32),
        "bp": 0.1 * jax.random.normal(kbp, (1, out_seq_len * out_dim), dtype=jnp.float32),
        "gamma": jnp.ones((1, out_dim), dtype=jnp.float32),
        "beta": jnp.zeros((1, out_dim), dtype=jnp.float32),
    }

    # One-time prepare (hoisted preprocessing); reuse `prepped` across forwards.
    prepped = prepare_image_prefix(params, out_dim=out_dim,
                                   out_seq_len=out_seq_len, image_hw=H * W)

    # hw_block=128 -> 2 grid steps at the demo size, exercising the streamed
    # pooled-sum accumulation path.
    out = image_prefix_forward(x, prepped, use_layernorm=True, hw_block=128)
    out = jax.block_until_ready(out)

    ref = image_prefix_reference(x, params, out_dim=out_dim,
                                 out_seq_len=out_seq_len, use_layernorm=True)
    assert out.shape == (B, out_seq_len, out_dim)
    # LayerNorm divides by a per-segment std ~0.1, amplifying MXU f32-emulation /
    # reassociation differences; 5e-3 still flags any real fusion or LN-mapping bug.
    max_diff = float(jnp.max(jnp.abs(out - ref)))
    assert jnp.allclose(out, ref, atol=5e-3, rtol=5e-3), f"mismatch vs reference: {max_diff}"

    print("KERNEL_OK")
</pallas_src>

<mosaic_0001>
module attributes {stable_mosaic.version = 11 : i64} {
  func.func @image_prefix_kernel(%arg0: i32, %arg1: memref<2x4x128xf32, #tpu.memory_space<vmem>>, %arg2: memref<4x256xf32, #tpu.memory_space<vmem>>, %arg3: memref<259x256xf32, #tpu.memory_space<vmem>>, %arg4: memref<2x256xf32, #tpu.memory_space<vmem>>, %arg5: memref<2x4xf32, #tpu.memory_space<vmem>>) attributes {dimension_semantics = [#tpu.dimension_semantics<arbitrary>], iteration_bounds = array<i64: 2>, scalar_prefetch = 0 : i64, scratch_operands = 1 : i64, tpu.core_type = #tpu.core_type<tc>, window_params = [{transform_indices = @transform_0, window_bounds = array<i64: 2, 4, 128>}, {pipeline_mode = #tpu.pipeline_mode<synchronous>, transform_indices = @transform_1, window_bounds = array<i64: 4, 256>}, {pipeline_mode = #tpu.pipeline_mode<synchronous>, transform_indices = @transform_2, window_bounds = array<i64: 259, 256>}, {pipeline_mode = #tpu.pipeline_mode<synchronous>, transform_indices = @transform_3, window_bounds = array<i64: 2, 256>}]} {
    %c0_i32 = arith.constant 0 : i32
    %0 = arith.cmpi eq, %arg0, %c0_i32 : i32
    %1 = arith.extui %0 : i1 to i32
    %c0_i32_0 = arith.constant 0 : i32
    %2 = arith.cmpi ne, %1, %c0_i32_0 : i32
    scf.if %2 {
      %cst_8 = arith.constant 0.000000e+00 : f32
      %11 = vector.broadcast %cst_8 : f32 to vector<2x4xf32>
      %c0_9 = arith.constant 0 : index
      %c0_10 = arith.constant 0 : index
      %12 = vector.load %arg5[%c0_9, %c0_10] : memref<2x4xf32, #tpu.memory_space<vmem>>, vector<2x4xf32>
      tpu.vector_store %arg5[%c0_9, %c0_10], %11 {strides = array<i32>} : memref<2x4xf32, #tpu.memory_space<vmem>>, vector<2x4xf32>,
    } else {
    }
    %c0 = arith.constant 0 : index
    %c0_1 = arith.constant 0 : index
    %3 = vector.load %arg5[%c0, %c0_1] : memref<2x4xf32, #tpu.memory_space<vmem>>, vector<2x4xf32>
    %c0_2 = arith.constant 0 : index
    %c0_3 = arith.constant 0 : index
    %c0_4 = arith.constant 0 : index
    %4 = vector.load %arg1[%c0_2, %c0_3, %c0_4] : memref<2x4x128xf32, #tpu.memory_space<vmem>>, vector<2x4x128xf32>
    %cst = arith.constant dense<0.000000e+00> : vector<2x4xf32>
    %5 = vector.multi_reduction <add>, %4, %cst [2] : vector<2x4x128xf32> to vector<2x4xf32>
    %6 = arith.addf %3, %5 : vector<2x4xf32>
    %c0_5 = arith.constant 0 : index
    %c0_6 = arith.constant 0 : index
    %7 = vector.load %arg5[%c0_5, %c0_6] : memref<2x4xf32, #tpu.memory_space<vmem>>, vector<2x4xf32>
    tpu.vector_store %arg5[%c0_5, %c0_6], %6 {strides = array<i32>} : memref<2x4xf32, #tpu.memory_space<vmem>>, vector<2x4xf32>,
    %c1_i32 = arith.constant 1 : i32
    %8 = arith.cmpi eq, %arg0, %c1_i32 : i32
    %9 = arith.extui %8 : i1 to i32
    %c0_i32_7 = arith.constant 0 : i32
    %10 = arith.cmpi ne, %9, %c0_i32_7 : i32
    scf.if %10 {
      %c0_8 = arith.constant 0 : index
      %c0_9 = arith.constant 0 : index
      %11 = vector.load %arg5[%c0_8, %c0_9] : memref<2x4xf32, #tpu.memory_space<vmem>>, vector<2x4xf32>
      %c0_10 = arith.constant 0 : index
      %c0_11 = arith.constant 0 : index
      %12 = vector.load %arg2[%c0_10, %c0_11] : memref<4x256xf32, #tpu.memory_space<vmem>>, vector<4x256xf32>
      %cst_12 = arith.constant dense<0.000000e+00> : vector<2x256xf32>
      %13 = tpu.matmul %11, %12, %cst_12 {dimension_numbers = #tpu.dot_dimension_numbers<[1], [0], [0], [1], [0, 0, 1, 1], [], []>} : vector<2x4xf32>, vector<4x256xf32>, vector<2x256xf32> -> vector<2x256xf32>
      %c256 = arith.constant 256 : index
      %c0_13 = arith.constant 0 : index
      %14 = vector.load %arg3[%c256, %c0_13] : memref<259x256xf32, #tpu.memory_space<vmem>>, vector<1x256xf32>
      %15 = vector.broadcast %14 : vector<1x256xf32> to vector<2x256xf32>
      %16 = arith.addf %13, %15 : vector<2x256xf32>
      %c0_14 = arith.constant 0 : index
      %c0_15 = arith.constant 0 : index
      %17 = vector.load %arg3[%c0_14, %c0_15] : memref<259x256xf32, #tpu.memory_space<vmem>>, vector<256x256xf32>
      %cst_16 = arith.constant dense<0.000000e+00> : vector<2x256xf32>
      %18 = tpu.matmul %16, %17, %cst_16 {dimension_numbers = #tpu.dot_dimension_numbers<[1], [0], [0], [1], [0, 0, 1, 1], [], []>} : vector<2x256xf32>, vector<256x256xf32>, vector<2x256xf32> -> vector<2x256xf32>
      %19 = arith.subf %16, %18 : vector<2x256xf32>
      %20 = arith.mulf %19, %19 : vector<2x256xf32>
      %cst_17 = arith.constant dense<0.000000e+00> : vector<2x256xf32>
      %21 = tpu.matmul %20, %17, %cst_17 {dimension_numbers = #tpu.dot_dimension_numbers<[1], [0], [0], [1], [0, 0, 1, 1], [], []>} : vector<2x256xf32>, vector<256x256xf32>, vector<2x256xf32> -> vector<2x256xf32>
      %cst_18 = arith.constant 9.99999974E-6 : f32
      %22 = vector.broadcast %cst_18 : f32 to vector<2x256xf32>
      %23 = arith.addf %21, %22 : vector<2x256xf32>
      %24 = math.rsqrt %23 : vector<2x256xf32>
      %25 = arith.mulf %19, %24 : vector<2x256xf32>
      %c257 = arith.constant 257 : index
      %c0_19 = arith.constant 0 : index
      %26 = vector.load %arg3[%c257, %c0_19] : memref<259x256xf32, #tpu.memory_space<vmem>>, vector<1x256xf32>
      %27 = vector.broadcast %26 : vector<1x256xf32> to vector<2x256xf32>
      %28 = arith.mulf %25, %27 : vector<2x256xf32>
      %c258 = arith.constant 258 : index
      %c0_20 = arith.constant 0 : index
      %29 = vector.load %arg3[%c258, %c0_20] : memref<259x256xf32, #tpu.memory_space<vmem>>, vector<1x256xf32>
      %30 = vector.broadcast %29 : vector<1x256xf32> to vector<2x256xf32>
      %31 = arith.addf %28, %30 : vector<2x256xf32>
      %c0_21 = arith.constant 0 : index
      %c0_22 = arith.constant 0 : index
      %32 = vector.load %arg4[%c0_21, %c0_22] : memref<2x256xf32, #tpu.memory_space<vmem>>, vector<2x256xf32>
      tpu.vector_store %arg4[%c0_21, %c0_22], %31 {strides = array<i32>} : memref<2x256xf32, #tpu.memory_space<vmem>>, vector<2x256xf32>,
    } else {
    }
    return
  }
  func.func @transform_0(%arg0: i32) -> (i32, i32, i32) {
    %c0_i32 = arith.constant 0 : i32
    %c0_i32_0 = arith.constant 0 : i32
    %c0_i32_1 = arith.constant 0 : i32
    return %c0_i32, %c0_i32_0, %arg0 : i32, i32, i32
  }
  func.func @transform_1(%arg0: i32) -> (i32, i32) {
    %c0_i32 = arith.constant 0 : i32
    %c0_i32_0 = arith.constant 0 : i32
    %c0_i32_1 = arith.constant 0 : i32
    return %c0_i32, %c0_i32_0 : i32, i32
  }
  func.func @transform_2(%arg0: i32) -> (i32, i32) {
    %c0_i32 = arith.constant 0 : i32
    %c0_i32_0 = arith.constant 0 : i32
    %c0_i32_1 = arith.constant 0 : i32
    return %c0_i32, %c0_i32_0 : i32, i32
  }
  func.func @transform_3(%arg0: i32) -> (i32, i32) {
    %c0_i32 = arith.constant 0 : i32
    %c0_i32_0 = arith.constant 0 : i32
    %c0_i32_1 = arith.constant 0 : i32
    return %c0_i32, %c0_i32_0 : i32, i32
  }
}

</mosaic_0001>

<llo_original>
// kernel: tpu_custom_call.1
$region0: #{tpu_custom_call.1}
  #allocation0 [shape = 'u32[]', space=smem, size = 0x4, offset = 0x4, fixed_abs, tag = 'smem constant byte address 0x4 - core index']
  #allocation1 [shape = 'u32[144,128]{1,0:T(1,128)}', space=vmem, size = 0x12000, scoped, tag = 'internal scratch']
  #allocation2 [shape = 'f32[2,4]{1,0:T(2,128)}', space=vmem, size = 0x400, scoped, tag = 'scratch operand']
  %s0 = inlined_call_operand.hbm [shape: f32[2,4,256], index: 0, kind: input, shape index: {}]
  %s1 = inlined_call_operand.hbm [shape: f32[4,256], index: 1, kind: input, shape index: {}]
  %s2 = inlined_call_operand.hbm [shape: f32[259,256], index: 2, kind: input, shape index: {}]
  %s3 = inlined_call_operand.hbm [shape: f32[2,256], index: 3, kind: output, shape index: {}]
  %s4 = sld [smem:[#allocation0]]
  $region65: #{tpu_custom_call.1} parent=0
    _
  %s6 = ssub.s32 1, %s4
  %s7 = scalar_select 0, %s6, %s4
  $region1: #{tpu_custom_call.1} parent=0
    #allocation3 [shape = 'u8[8192]{0}', space=vmem, size = 0x2000, scoped, tag = 'input window, operand 0']
    #allocation4 [shape = 's32[2]{0}', space=sflag, size = 0x8, scoped, tag = 'scoped memory for tpu_custom_call.1']
    #allocation5 [shape = 's32[2]{0}', space=sflag, size = 0x8, scoped, tag = 'scoped memory for tpu_custom_call.1']
    #allocation6 [shape = 'u8[4096]{0}', space=vmem, size = 0x1000, scoped, tag = 'input window, operand 1, single buffered']
    #allocation7 [shape = 's32[1]{0}', space=sflag, size = 0x4, scoped, tag = 'scoped memory for tpu_custom_call.1']
    #allocation8 [shape = 'u8[270336]{0}', space=vmem, size = 0x42000, scoped, tag = 'input window, operand 2, single buffered']
    #allocation9 [shape = 'u8[2048]{0}', space=vmem, size = 0x800, scoped, tag = 'output window, operand 0, single buffered']
    %8 = vsyncpa [#allocation4], 0
    %s9 = scalar_lea.sflag [#allocation4], 1
    %10 = vsyncpa %s9, 0
    %11 = vsyncpa [#allocation7], 0
    %12 = vsyncpa [#allocation5], 0
    loop: start=0, step=1, limit=4
    $region2: #{tpu_custom_call.1} parent=1 // loop_pre_header
      _
    $region3: #{tpu_custom_call.1} parent=1 // loop_header
      %s14 = sphi 0, %s18
      %p15 = scmp.ge.s32.totalorder %s14, 4
      %s24 = sphi 0, %s26
      %s27 = sphi 0, %s24
      %s28 = sphi 0, %s27
      %s44 = sphi 0, %s28
      %s48 = sphi 0, %s48
      %s50 = sphi 0, %s48
      %s51 = sphi 0, %s50
      %s65 = sphi 0, %s51
      %s69 = sphi 0, %s69
      %s71 = sphi 0, %s69
      %s72 = sphi 0, %s71
      %s86 = sphi 0, %s72
      %s90 = sphi 0, %s90
      %s92 = sphi 0, %s90
      %s93 = sphi 0, %s92
      %s107 = sphi 0, %s93
    $region4: #{tpu_custom_call.1} parent=1 // loop_header_branch
      %17 = sbr.rel (%p15) target = $region8
    $region5: #{tpu_custom_call.1} parent=1 // loop_body
      %s19 = ssub.s32 %s14, 1
      %s20 = ssub.s32 %s14, 2
      %s21 = sadd.s32 %s14, 1
      %s22 = ssub.s32 %s14, %s21
      %p23 = scmp.eq.s32.totalorder %s22, 0
      %s25 = sadd.s32 %s24, 1
      %s26 = scalar_select %p23, %s24, %s25
      %p29 = pneg %p23
      %p30 = scmp.eq.s32.totalorder %s14, 1
      %p31 = por %p29, %p30
      %p32 = scmp.ne.s32.totalorder %s24, %s27
      %p33 = scmp.eq.s32.totalorder %s14, 0
      %p34 = por %p32, %p33
      %p35 = scmp.ne.s32.totalorder %s24, %s27
      %p36 = scmp.eq.s32.totalorder %s19, 1
      %p37 = por %p35, %p36
      %p38 = scmp.ne.s32.totalorder %s27, %s28
      %p39 = scmp.eq.s32.totalorder %s19, 0
      %p40 = por %p38, %p39
      %p41 = scmp.ne.s32.totalorder %s27, %s28
      %p42 = scmp.eq.s32.totalorder %s20, 1
      %p43 = por %p41, %p42
      %p45 = scmp.ne.s32.totalorder %s28, %s44
      %p46 = scmp.eq.s32.totalorder %s20, 0
      %p47 = por %p45, %p46
      %s49 = sadd.s32 %s48, 1
      %p52 = scmp.eq.s32.totalorder %s14, 1
      %p53 = scmp.ne.s32.totalorder %s48, %s50
      %p54 = scmp.eq.s32.totalorder %s14, 0
      %p55 = por %p53, %p54
      %p56 = scmp.ne.s32.totalorder %s48, %s50
      %p57 = scmp.eq.s32.totalorder %s19, 1
      %p58 = por %p56, %p57
      %p59 = scmp.ne.s32.totalorder %s50, %s51
      %p60 = scmp.eq.s32.totalorder %s19, 0
      %p61 = por %p59, %p60
      %p62 = scmp.ne.s32.totalorder %s50, %s51
      %p63 = scmp.eq.s32.totalorder %s20, 1
      %p64 = por %p62, %p63
      %p66 = scmp.ne.s32.totalorder %s51, %s65
      %p67 = scmp.eq.s32.totalorder %s20, 0
      %p68 = por %p66, %p67
      %s70 = sadd.s32 %s69, 1
      %p73 = scmp.eq.s32.totalorder %s14, 1
      %p74 = scmp.ne.s32.totalorder %s69, %s71
      %p75 = scmp.eq.s32.totalorder %s14, 0
      %p76 = por %p74, %p75
      %p77 = scmp.ne.s32.totalorder %s69, %s71
      %p78 = scmp.eq.s32.totalorder %s19, 1
      %p79 = por %p77, %p78
      %p80 = scmp.ne.s32.totalorder %s71, %s72
      %p81 = scmp.eq.s32.totalorder %s19, 0
      %p82 = por %p80, %p81
      %p83 = scmp.ne.s32.totalorder %s71, %s72
      %p84 = scmp.eq.s32.totalorder %s20, 1
      %p85 = por %p83, %p84
      %p87 = scmp.ne.s32.totalorder %s72, %s86
      %p88 = scmp.eq.s32.totalorder %s20, 0
      %p89 = por %p87, %p88
      %s91 = sadd.s32 %s90, 1
      %p94 = scmp.eq.s32.totalorder %s14, 1
      %p95 = scmp.ne.s32.totalorder %s90, %s92
      %p96 = scmp.eq.s32.totalorder %s14, 0
      %p97 = por %p95, %p96
      %p98 = scmp.ne.s32.totalorder %s90, %s92
      %p99 = scmp.eq.s32.totalorder %s19, 1
      %p100 = por %p98, %p99
      %p101 = scmp.ne.s32.totalorder %s92, %s93
      %p102 = scmp.eq.s32.totalorder %s19, 0
      %p103 = por %p101, %p102
      %p104 = scmp.ne.s32.totalorder %s92, %s93
      %p105 = scmp.eq.s32.totalorder %s20, 1
      %p106 = por %p104, %p105
      %p108 = scmp.ne.s32.totalorder %s93, %s107
      %p109 = scmp.eq.s32.totalorder %s20, 0
      %p110 = por %p108, %p109
      %p111 = scmp.le.s32.totalorder 1, %s14
      %p112 = scmp.lt.s32.totalorder %s14, 3
      %p113 = pnand %p111, %p112
      %p114 = pneg %p113
      // Predicated region
      $region9: #{tpu_custom_call.1} parent=5 // pred_check
        _
      $region10: #{tpu_custom_call.1} parent=5 // pred_check_branch
        %116 = sbr.rel (%p113) target = $region12
      $region11: #{tpu_custom_call.1} parent=5 // pred_region
        %s117 = ssub.s32 %s14, 1
        // Predicated region
        $region13: #{tpu_custom_call.1} parent=11 // pred_check
          %p118 = pneg %p61
        $region14: #{tpu_custom_call.1} parent=11 // pred_check_branch
          %120 = sbr.rel (%p118) target = $region16
        $region15: #{tpu_custom_call.1} parent=11 // pred_region
          %s122 = ssub.s32 128, 128
          %123 = vsyncadd [#allocation7], %s122
          %s125 = sshll.u32 [#allocation6], 4
          %s126 = int_to_ptr.vmem [resolvable:$true] %s125
          %128 = dma.hbm_to_vmem [thread:$0]  %s1, 128, %s126, [#allocation7]
        $region16: #{tpu_custom_call.1} parent=11 // pred_fallthru
          _
        // Predicated region
        $region17: #{tpu_custom_call.1} parent=11 // pred_check
          %p129 = pneg %p82
        $region18: #{tpu_custom_call.1} parent=11 // pred_check_branch
          %131 = sbr.rel (%p129) target = $region20
        $region19: #{tpu_custom_call.1} parent=11 // pred_region
          %s133 = ssub.s32 8448, 8448
          %134 = vsyncadd [#allocation7], %s133
          %s135 = sshll.u32 [#allocation8], 4
          %s136 = int_to_ptr.vmem [resolvable:$true] %s135
          %141 = dma.hbm_to_vmem [thread:$0]  %s2, 8448, %s136, [#allocation7], 256, 256, 16
        $region20: #{tpu_custom_call.1} parent=11 // pred_fallthru
          _
      $region12: #{tpu_custom_call.1} parent=5 // pred_fallthru
        _
      %p142 = scmp.lt.s32.totalorder %s14, 2
      // Predicated region
      $region21: #{tpu_custom_call.1} parent=5 // pred_check
        %p143 = pneg %p142
      $region22: #{tpu_custom_call.1} parent=5 // pred_check_branch
        %145 = sbr.rel (%p143) target = $region24
      $region23: #{tpu_custom_call.1} parent=5 // pred_region
        // Predicated region
        $region25: #{tpu_custom_call.1} parent=23 // pred_check
          %p146 = pneg %p34
        $region26: #{tpu_custom_call.1} parent=23 // pred_check_branch
          %148 = sbr.rel (%p146) target = $region28
        $region27: #{tpu_custom_call.1} parent=23 // pred_region
          %s149 = sand.u32 %s24, 1
          %s150 = scalar_lea.sflag [#allocation4], %s149
          %s151 = sand.u32 %s24, 1
          %s152 = smul.addr %s151, 8
          %s153 = scalar_lea.vmem [#allocation3], %s152
          %s155 = ssub.s32 128, 128
          %156 = vsyncadd %s150, %s155
          %s157 = smul.addr %s14, 64
          %s158 = scalar_lea.hbm %s0, %s157
          %s159 = sshll.u32 %s153, 4
          %s160 = int_to_ptr.vmem [resolvable:$true] %s159
          %165 = dma.hbm_to_vmem [thread:$0]  %s158, 128, %s160, %s150, 128, 64, 4
        $region28: #{tpu_custom_call.1} parent=23 // pred_fallthru
          _
      $region24: #{tpu_custom_call.1} parent=5 // pred_fallthru
        _
      %p166 = scmp.le.s32.totalorder 1, %s14
      %p167 = scmp.lt.s32.totalorder %s14, 3
      %p168 = pnand %p166, %p167
      %p169 = pneg %p168
      // Predicated region
      $region29: #{tpu_custom_call.1} parent=5 // pred_check
        _
      $region30: #{tpu_custom_call.1} parent=5 // pred_check_branch
        %171 = sbr.rel (%p168) target = $region32
      $region31: #{tpu_custom_call.1} parent=5 // pred_region
        %s172 = ssub.s32 %s14, 1
        %s173 = sand.u32 %s27, 1
        %s174 = scalar_lea.sflag [#allocation4], %s173
        %s175 = sand.u32 %s27, 1
        %s176 = smul.addr %s175, 8
        %s177 = scalar_lea.vmem [#allocation3], %s176
        // Predicated region
        $region33: #{tpu_custom_call.1} parent=31 // pred_check
          %p178 = pneg %p40
        $region34: #{tpu_custom_call.1} parent=31 // pred_check_branch
          %180 = sbr.rel (%p178) target = $region36
        $region35: #{tpu_custom_call.1} parent=31 // pred_region
          %181 = dma.done %s174, 128
        $region36: #{tpu_custom_call.1} parent=31 // pred_fallthru
          _
        // Predicated region
        $region37: #{tpu_custom_call.1} parent=31 // pred_check
          %p182 = pneg %p61
        $region38: #{tpu_custom_call.1} parent=31 // pred_check_branch
          %184 = sbr.rel (%p182) target = $region40
        $region39: #{tpu_custom_call.1} parent=31 // pred_region
          %185 = dma.done [#allocation7], 128
        $region40: #{tpu_custom_call.1} parent=31 // pred_fallthru
          _
        // Predicated region
        $region41: #{tpu_custom_call.1} parent=31 // pred_check
          %p186 = pneg %p82
        $region42: #{tpu_custom_call.1} parent=31 // pred_check_branch
          %188 = sbr.rel (%p186) target = $region44
        $region43: #{tpu_custom_call.1} parent=31 // pred_region
          %189 = dma.done [#allocation7], 8448
        $region44: #{tpu_custom_call.1} parent=31 // pred_fallthru
          _
        %s190 = sand.u32 %s27, 1
        %s191 = scalar_lea.sflag [#allocation4], %s190
        %s192 = sand.u32 %s27, 1
        %s193 = smul.addr %s192, 8
        %s194 = scalar_lea.vmem [#allocation3], %s193
        %p195 = pneg %p40
        %p196 = pneg %p37
        %p197 = pneg %p61
        %p198 = pneg %p58
        %p199 = pneg %p82
        %p200 = pneg %p79
        %p201 = pneg %p103
        %p202 = pneg %p100
        %p203 = scmp.eq.s32.totalorder %s19, 0
        // Predicated region
        $region45: #{tpu_custom_call.1} parent=31 // pred_check
          %p204 = pneg %p203
        $region46: #{tpu_custom_call.1} parent=31 // pred_check_branch
          %206 = sbr.rel (%p204) target = $region48
        $region47: #{tpu_custom_call.1} parent=31 // pred_region
          %vm207 = vcmask 25600
          %208 = vst.msk [vmem:[#allocation2] sm:$0x3] %vm207, 0.0
        $region48: #{tpu_custom_call.1} parent=31 // pred_fallthru
          _
        %v209 = vld [vmem:[#allocation2] sm:$0x3]
        %v210 = vld [vmem:[%s177] sm:$0xf]
        %v211 = vld [vmem:[%s177 + $0x4] sm:$0xf]
        %vm212 = vcmask 1043456
        %v213 = vsel %vm212, %v210, 0.0
        %214 = vadd.xlane.f32.xlu0 %v213
        %v215 = vpop.xlane.xlu0 %214
        %v216 = vsel %vm212, %v211, 0.0
        %217 = vadd.xlane.f32.xlu0 %v216
        %v218 = vpop.xlane.xlu0 %217
        %v221 = vlaneseq
        %v222 = vand.u32 %v221, 127
        %v223 = vlaneseq
        %v224 = vshrl.u32 %v223, 7
        %v225 = vsub.s32 %v222, %v224
        %v226 = vrot.slane %v215, %v225
        %v227 = vlaneseq
        %v228 = vshrl.u32 %v227, 7
        %v229 = vsub.s32 %v222, %v228
        %v230 = vrot.slane %v218, %v229
        %vm231 = vcmask 1041409
        %v232 = vsel %vm231, %v230, %v226
        %v234 = vadd.f32 %v209, %v232
        %vm235 = vcmask 25600
        %236 = vst.msk [vmem:[#allocation2] sm:$0x3] %vm235, %v234
        %p237 = scmp.eq.s32.totalorder %s19, 1
        // Predicated region
        $region49: #{tpu_custom_call.1} parent=31 // pred_check
          %p238 = pneg %p237
        $region50: #{tpu_custom_call.1} parent=31 // pred_check_branch
          %240 = sbr.rel (%p238) target = $region52
        $region51: #{tpu_custom_call.1} parent=31 // pred_region
          %v241 = vld [vmem:[#allocation2] sm:$0x3]
          %v242 = vld [vmem:[#allocation6] sm:$0xff]
          %s243 = scalar_lea.vmem [#allocation8], 512
          %v244 = vld [vmem:[%s243] ss:$8 sm:$0x3]
          %v246 = vlaneseq
          %v247 = vshrl.u32 %v246, 7
          %v248 = vsub.s32 0, %v247
          %v249 = vrot.slane %v244, %v248
          %v250 = vlaneseq
          %v251 = vshrl.u32 %v250, 7
          %v252 = vsub.s32 1, %v251
          %v253 = vrot.slane %v244, %v252
          %v257 = vcombine.high %v242, %v242
          %vm258 = vcmask 31744
          %v260 = vsel %vm258, %v241, 0
          %v262 = vsel %vm212, %v242, 0
          %v264 = vsel %vm212, %v257, 0
          %266 = vmatprep.subr.mxu0 0.0
          %267 = vmatpush1.msra.mxu0 0.0
          %268 = vmatprep.subr.mxu0 0.0
          %269 = vmatpush1.msra.mxu0 0.0
          %270 = vmatprep.subr.mxu0 0.0
          %271 = vmatpush1.msra.mxu0 0.0
          %272 = vmatprep.subr.mxu0 0.0
          %273 = vmatpush1.msra.mxu0 0.0
          %274 = vmatprep.subr.mxu0 0.0
          %275 = vmatpush1.msra.mxu0 0.0
          %276 = vmatprep.subr.mxu0 0.0
          %277 = vmatpush1.msra.mxu0 0.0
          %278 = vmatprep.subr.mxu0 0.0
          %279 = vmatpush1.msra.mxu0 0.0
          %280 = vmatprep.subr.mxu0 0.0
          %281 = vmatpush1.msra.mxu0 0.0
          %282 = vmatprep.subr.mxu0 0.0
          %283 = vmatpush1.msra.mxu0 0.0
          %284 = vmatprep.subr.mxu0 0.0
          %285 = vmatpush1.msra.mxu0 0.0
          %286 = vmatprep.subr.mxu0 0.0
          %287 = vmatpush1.msra.mxu0 0.0
          %288 = vmatprep.subr.mxu0 0.0
          %289 = vmatpush1.msra.mxu0 0.0
          %290 = vmatprep.subr.mxu0 0.0
          %291 = vmatpush1.msra.mxu0 0.0
          %292 = vmatprep.subr.mxu0 0.0
          %293 = vmatpush1.msra.mxu0 0.0
          %294 = vmatprep.subr.mxu0 0.0
          %295 = vmatpush1.msra.mxu0 0.0
          %296 = vmatprep.subr.mxu0 %v264
          %297 = vmatpush1.msra.mxu0 %v262
          %298 = vmatprep.subr.mxu0 0.0
          %299 = vmatpush2.msra.mxu0 0.0
          %300 = vmatprep.subr.mxu0 0.0
          %301 = vmatpush2.msra.mxu0 0.0
          %302 = vmatprep.subr.mxu0 0.0
          %303 = vmatpush2.msra.mxu0 0.0
          %304 = vmatprep.subr.mxu0 0.0
          %305 = vmatpush2.msra.mxu0 0.0
          %306 = vmatprep.subr.mxu0 0.0
          %307 = vmatpush2.msra.mxu0 0.0
          %308 = vmatprep.subr.mxu0 0.0
          %309 = vmatpush2.msra.mxu0 0.0
          %310 = vmatprep.subr.mxu0 0.0
          %311 = vmatpush2.msra.mxu0 0.0
          %312 = vmatprep.subr.mxu0 0.0
          %313 = vmatpush2.msra.mxu0 0.0
          %314 = vmatprep.subr.mxu0 0.0
          %315 = vmatpush2.msra.mxu0 0.0
          %316 = vmatprep.subr.mxu0 0.0
          %317 = vmatpush2.msra.mxu0 0.0
          %318 = vmatprep.subr.mxu0 0.0
          %319 = vmatpush2.msra.mxu0 0.0
          %320 = vmatprep.subr.mxu0 0.0
          %321 = vmatpush2.msra.mxu0 0.0
          %322 = vmatprep.subr.mxu0 0.0
          %323 = vmatpush2.msra.mxu0 0.0
          %324 = vmatprep.subr.mxu0 0.0
          %325 = vmatpush2.msra.mxu0 0.0
          %326 = vmatprep.subr.mxu0 0.0
          %327 = vmatpush2.msra.mxu0 0.0
          %328 = vmatprep.subr.mxu0 0.0
          %329 = vmatpush2.msra.mxu0 0.0
          %330 = vmatprep.mubr.f32.mxu0 0.0
          %331 = vmatmul.mubr.f32.gmra.mxu0 %v260
          %v332 = vpop.f32.mrf.mxu0
          %v333 = vadd.f32 %v249, %v332
          %v334 = vpop.f32.mrf.mxu0
          %v335 = vadd.f32 %v253, %v334
          %336 = vdwg.mxu0
          %v337 = vld [vmem:[#allocation8] sm:$0xff]
          %v338 = vld [vmem:[#allocation8 + $0x8] sm:$0xff]
          %v339 = vld [vmem:[#allocation8 + $0x10] sm:$0xff]
          %v340 = vld [vmem:[#allocation8 + $0x18] sm:$0xff]
          %v341 = vld [vmem:[#allocation8 + $0x20] sm:$0xff]
          %v342 = vld [vmem:[#allocation8 + $0x28] sm:$0xff]
          %v343 = vld [vmem:[#allocation8 + $0x30] sm:$0xff]
          %v344 = vld [vmem:[#allocation8 + $0x38] sm:$0xff]
          %v345 = vld [vmem:[#allocation8 + $0x40] sm:$0xff]
          %v346 = vld [vmem:[#allocation8 + $0x48] sm:$0xff]
          %v347 = vld [vmem:[#allocation8 + $0x50] sm:$0xff]
          %v348 = vld [vmem:[#allocation8 + $0x58] sm:$0xff]
          %v349 = vld [vmem:[#allocation8 + $0x60] sm:$0xff]
          %v350 = vld [vmem:[#allocation8 + $0x68] sm:$0xff]
          %v351 = vld [vmem:[#allocation8 + $0x70] sm:$0xff]
          %v352 = vld [vmem:[#allocation8 + $0x78] sm:$0xff]
          %v353 = vld [vmem:[#allocation8 + $0x80] sm:$0xff]
          %v354 = vld [vmem:[#allocation8 + $0x88] sm:$0xff]
          %v355 = vld [vmem:[#allocation8 + $0x90] sm:$0xff]
          %v356 = vld [vmem:[#allocation8 + $0x98] sm:$0xff]
          %v357 = vld [vmem:[#allocation8 + $0xa0] sm:$0xff]
          %v358 = vld [vmem:[#allocation8 + $0xa8] sm:$0xff]
          %v359 = vld [vmem:[#allocation8 + $0xb0] sm:$0xff]
          %v360 = vld [vmem:[#allocation8 + $0xb8] sm:$0xff]
          %v361 = vld [vmem:[#allocation8 + $0xc0] sm:$0xff]
          %v362 = vld [vmem:[#allocation8 + $0xc8] sm:$0xff]
          %v363 = vld [vmem:[#allocation8 + $0xd0] sm:$0xff]
          %v364 = vld [vmem:[#allocation8 + $0xd8] sm:$0xff]
          %v365 = vld [vmem:[#allocation8 + $0xe0] sm:$0xff]
          %v366 = vld [vmem:[#allocation8 + $0xe8] sm:$0xff]
          %v367 = vld [vmem:[#allocation8 + $0xf0] sm:$0xff]
          %v368 = vld [vmem:[#allocation8 + $0xf8] sm:$0xff]
          %v369 = vld [vmem:[#allocation8 + $0x100] sm:$0xff]
          %v370 = vld [vmem:[#allocation8 + $0x108] sm:$0xff]
          %v371 = vld [vmem:[#allocation8 + $0x110] sm:$0xff]
          %v372 = vld [vmem:[#allocation8 + $0x118] sm:$0xff]
          %v373 = vld [vmem:[#allocation8 + $0x120] sm:$0xff]
          %v374 = vld [vmem:[#allocation8 + $0x128] sm:$0xff]
          %v375 = vld [vmem:[#allocation8 + $0x130] sm:$0xff]
          %v376 = vld [vmem:[#allocation8 + $0x138] sm:$0xff]
          %v377 = vld [vmem:[#allocation8 + $0x140] sm:$0xff]
          %v378 = vld [vmem:[#allocation8 + $0x148] sm:$0xff]
          %v379 = vld [vmem:[#allocation8 + $0x150] sm:$0xff]
          %v380 = vld [vmem:[#allocation8 + $0x158] sm:$0xff]
          %v381 = vld [vmem:[#allocation8 + $0x160] sm:$0xff]
          %v382 = vld [vmem:[#allocation8 + $0x168] sm:$0xff]
          %v383 = vld [vmem:[#allocation8 + $0x170] sm:$0xff]
          %v384 = vld [vmem:[#allocation8 + $0x178] sm:$0xff]
          %v385 = vld [vmem:[#allocation8 + $0x180] sm:$0xff]
          %v386 = vld [vmem:[#allocation8 + $0x188] sm:$0xff]
          %v387 = vld [vmem:[#allocation8 + $0x190] sm:$0xff]
          %v388 = vld [vmem:[#allocation8 + $0x198] sm:$0xff]
          %v389 = vld [vmem:[#allocation8 + $0x1a0] sm:$0xff]
          %v390 = vld [vmem:[#allocation8 + $0x1a8] sm:$0xff]
          %v391 = vld [vmem:[#allocation8 + $0x1b0] sm:$0xff]
          %v392 = vld [vmem:[#allocation8 + $0x1b8] sm:$0xff]
          %v393 = vld [vmem:[#allocation8 + $0x1c0] sm:$0xff]
          %v394 = vld [vmem:[#allocation8 + $0x1c8] sm:$0xff]
          %v395 = vld [vmem:[#allocation8 + $0x1d0] sm:$0xff]
          %v396 = vld [vmem:[#allocation8 + $0x1d8] sm:$0xff]
          %v397 = vld [vmem:[#allocation8 + $0x1e0] sm:$0xff]
          %v398 = vld [vmem:[#allocation8 + $0x1e8] sm:$0xff]
          %v399 = vld [vmem:[#allocation8 + $0x1f0] sm:$0xff]
          %v400 = vld [vmem:[#allocation8 + $0x1f8] sm:$0xff]
          %401 = vmatprep.subr.mxu0 %v368
          %402 = vmatpush1.msra.mxu0 %v367
          %403 = vmatprep.subr.mxu0 %v366
          %404 = vmatpush1.msra.mxu0 %v365
          %405 = vmatprep.subr.mxu0 %v364
          %406 = vmatpush1.msra.mxu0 %v363
          %407 = vmatprep.subr.mxu0 %v362
          %408 = vmatpush1.msra.mxu0 %v361
          %409 = vmatprep.subr.mxu0 %v360
          %410 = vmatpush1.msra.mxu0 %v359
          %411 = vmatprep.subr.mxu0 %v358
          %412 = vmatpush1.msra.mxu0 %v357
          %413 = vmatprep.subr.mxu0 %v356
          %414 = vmatpush1.msra.mxu0 %v355
          %415 = vmatprep.subr.mxu0 %v354
          %416 = vmatpush1.msra.mxu0 %v353
          %417 = vmatprep.subr.mxu0 %v352
          %418 = vmatpush1.msra.mxu0 %v351
          %419 = vmatprep.subr.mxu0 %v350
          %420 = vmatpush1.msra.mxu0 %v349
          %421 = vmatprep.subr.mxu0 %v348
          %422 = vmatpush1.msra.mxu0 %v347
          %423 = vmatprep.subr.mxu0 %v346
          %424 = vmatpush1.msra.mxu0 %v345
          %425 = vmatprep.subr.mxu0 %v344
          %426 = vmatpush1.msra.mxu0 %v343
          %427 = vmatprep.subr.mxu0 %v342
          %428 = vmatpush1.msra.mxu0 %v341
          %429 = vmatprep.subr.mxu0 %v340
          %430 = vmatpush1.msra.mxu0 %v339
          %431 = vmatprep.subr.mxu0 %v338
          %432 = vmatpush1.msra.mxu0 %v337
          %433 = vmatprep.subr.mxu0 %v400
          %434 = vmatpush2.msra.mxu0 %v399
          %435 = vmatprep.subr.mxu0 %v398
          %436 = vmatpush2.msra.mxu0 %v397
          %437 = vmatprep.subr.mxu0 %v396
          %438 = vmatpush2.msra.mxu0 %v395
          %439 = vmatprep.subr.mxu0 %v394
          %440 = vmatpush2.msra.mxu0 %v393
          %441 = vmatprep.subr.mxu0 %v392
          %442 = vmatpush2.msra.mxu0 %v391
          %443 = vmatprep.subr.mxu0 %v390
          %444 = vmatpush2.msra.mxu0 %v389
          %445 = vmatprep.subr.mxu0 %v388
          %446 = vmatpush2.msra.mxu0 %v387
          %447 = vmatprep.subr.mxu0 %v386
          %448 = vmatpush2.msra.mxu0 %v385
          %449 = vmatprep.subr.mxu0 %v384
          %450 = vmatpush2.msra.mxu0 %v383
          %451 = vmatprep.subr.mxu0 %v382
          %452 = vmatpush2.msra.mxu0 %v381
          %453 = vmatprep.subr.mxu0 %v380
          %454 = vmatpush2.msra.mxu0 %v379
          %455 = vmatprep.subr.mxu0 %v378
          %456 = vmatpush2.msra.mxu0 %v377
          %457 = vmatprep.subr.mxu0 %v376
          %458 = vmatpush2.msra.mxu0 %v375
          %459 = vmatprep.subr.mxu0 %v374
          %460 = vmatpush2.msra.mxu0 %v373
          %461 = vmatprep.subr.mxu0 %v372
          %462 = vmatpush2.msra.mxu0 %v371
          %463 = vmatprep.subr.mxu0 %v370
          %464 = vmatpush2.msra.mxu0 %v369
          %465 = vmatprep.mubr.f32.mxu0 %v335
          %466 = vmatmul.mubr.f32.gmra.mxu0 %v333
          %v467 = vpop.f32.mrf.mxu0
          %v468 = vadd.f32 0.0, %v467
          %v469 = vpop.f32.mrf.mxu0
          %v470 = vadd.f32 0.0, %v469
          %471 = vdwg.mxu0
          %v472 = vsub.f32 %v333, %v468
          %v473 = vsub.f32 %v335, %v470
          %v474 = vmul.f32 %v472, %v472
          %v475 = vmul.f32 %v473, %v473
          %476 = vmatprep.subr.mxu0 %v368
          %477 = vmatpush1.msra.mxu0 %v367
          %478 = vmatprep.subr.mxu0 %v366
          %479 = vmatpush1.msra.mxu0 %v365
          %480 = vmatprep.subr.mxu0 %v364
          %481 = vmatpush1.msra.mxu0 %v363
          %482 = vmatprep.subr.mxu0 %v362
          %483 = vmatpush1.msra.mxu0 %v361
          %484 = vmatprep.subr.mxu0 %v360
          %485 = vmatpush1.msra.mxu0 %v359
          %486 = vmatprep.subr.mxu0 %v358
          %487 = vmatpush1.msra.mxu0 %v357
          %488 = vmatprep.subr.mxu0 %v356
          %489 = vmatpush1.msra.mxu0 %v355
          %490 = vmatprep.subr.mxu0 %v354
          %491 = vmatpush1.msra.mxu0 %v353
          %492 = vmatprep.subr.mxu0 %v352
          %493 = vmatpush1.msra.mxu0 %v351
          %494 = vmatprep.subr.mxu0 %v350
          %495 = vmatpush1.msra.mxu0 %v349
          %496 = vmatprep.subr.mxu0 %v348
          %497 = vmatpush1.msra.mxu0 %v347
          %498 = vmatprep.subr.mxu0 %v346
          %499 = vmatpush1.msra.mxu0 %v345
          %500 = vmatprep.subr.mxu0 %v344
          %501 = vmatpush1.msra.mxu0 %v343
          %502 = vmatprep.subr.mxu0 %v342
          %503 = vmatpush1.msra.mxu0 %v341
          %504 = vmatprep.subr.mxu0 %v340
          %505 = vmatpush1.msra.mxu0 %v339
          %506 = vmatprep.subr.mxu0 %v338
          %507 = vmatpush1.msra.mxu0 %v337
          %508 = vmatprep.subr.mxu0 %v400
          %509 = vmatpush2.msra.mxu0 %v399
          %510 = vmatprep.subr.mxu0 %v398
          %511 = vmatpush2.msra.mxu0 %v397
          %512 = vmatprep.subr.mxu0 %v396
          %513 = vmatpush2.msra.mxu0 %v395
          %514 = vmatprep.subr.mxu0 %v394
          %515 = vmatpush2.msra.mxu0 %v393
          %516 = vmatprep.subr.mxu0 %v392
          %517 = vmatpush2.msra.mxu0 %v391
          %518 = vmatprep.subr.mxu0 %v390
          %519 = vmatpush2.msra.mxu0 %v389
          %520 = vmatprep.subr.mxu0 %v388
          %521 = vmatpush2.msra.mxu0 %v387
          %522 = vmatprep.subr.mxu0 %v386
          %523 = vmatpush2.msra.mxu0 %v385
          %524 = vmatprep.subr.mxu0 %v384
          %525 = vmatpush2.msra.mxu0 %v383
          %526 = vmatprep.subr.mxu0 %v382
          %527 = vmatpush2.msra.mxu0 %v381
          %528 = vmatprep.subr.mxu0 %v380
          %529 = vmatpush2.msra.mxu0 %v379
          %530 = vmatprep.subr.mxu0 %v378
          %531 = vmatpush2.msra.mxu0 %v377
          %532 = vmatprep.subr.mxu0 %v376
          %533 = vmatpush2.msra.mxu0 %v375
          %534 = vmatprep.subr.mxu0 %v374
          %535 = vmatpush2.msra.mxu0 %v373
          %536 = vmatprep.subr.mxu0 %v372
          %537 = vmatpush2.msra.mxu0 %v371
          %538 = vmatprep.subr.mxu0 %v370
          %539 = vmatpush2.msra.mxu0 %v369
          %540 = vmatprep.mubr.f32.mxu0 %v475
          %541 = vmatmul.mubr.f32.gmra.mxu0 %v474
          %v542 = vpop.f32.mrf.mxu0
          %v543 = vadd.f32 1e-05, %v542
          %v544 = vpop.f32.mrf.mxu0
          %v545 = vadd.f32 1e-05, %v544
          %546 = vdwg.mxu0
          %v547 = vrsqrt.pop %v543
          %v548 = vrsqrt.pop %v545
          %v549 = vmul.f32 %v472, %v547
          %v550 = vmul.f32 %v473, %v548
          %s551 = scalar_lea.vmem [#allocation8], 513
          %v552 = vld [vmem:[%s551] ss:$8 sm:$0x3]
          %v554 = vlaneseq
          %v555 = vshrl.u32 %v554, 7
          %v556 = vsub.s32 0, %v555
          %v557 = vrot.slane %v552, %v556
          %v558 = vlaneseq
          %v559 = vshrl.u32 %v558, 7
          %v560 = vsub.s32 1, %v559
          %v561 = vrot.slane %v552, %v560
          %v564 = vmul.f32 %v549, %v557
          %v565 = vmul.f32 %v550, %v561
          %s566 = scalar_lea.vmem [#allocation8], 514
          %v567 = vld [vmem:[%s566] ss:$8 sm:$0x3]
          %v569 = vlaneseq
          %v570 = vshrl.u32 %v569, 7
          %v571 = vsub.s32 0, %v570
          %v572 = vrot.slane %v567, %v571
          %v573 = vlaneseq
          %v574 = vshrl.u32 %v573, 7
          %v575 = vsub.s32 1, %v574
          %v576 = vrot.slane %v567, %v575
          %v579 = vadd.f32 %v564, %v572
          %v580 = vadd.f32 %v565, %v576
          %v583 = vcombine.low %v579, %v580
          %v585 = vunpack.c.l.s4 1983009808
          %v586 = vunpack.c.0.s8 %v585
          %v587 = vlaneseq
          %v588 = vshrl.u32 %v587, 7
          %v589 = vsub.s32 %v586, %v588
          %v590 = vrot.slane %v583, %v589
          %592 = vst [vmem:[#allocation9] sm:$0xf] %v590
        $region52: #{tpu_custom_call.1} parent=31 // pred_fallthru
          _
        // Predicated region
        $region53: #{tpu_custom_call.1} parent=31 // pred_check
          %p593 = pneg %p100
        $region54: #{tpu_custom_call.1} parent=31 // pred_check_branch
          %595 = sbr.rel (%p593) target = $region56
        $region55: #{tpu_custom_call.1} parent=31 // pred_region
          %s597 = ssub.s32 64, 64
          %598 = vsyncadd [#allocation5], %s597
          %s600 = sshll.u32 [#allocation9], 4
          %s601 = int_to_ptr.vmem [resolvable:$true] %s600
          %603 = dma.vmem_to_hbm [thread:$0]  %s601, 64, %s3, [#allocation5]
        $region56: #{tpu_custom_call.1} parent=31 // pred_fallthru
          _
        // Predicated region
        $region57: #{tpu_custom_call.1} parent=31 // pred_check
          %p604 = pneg %p100
        $region58: #{tpu_custom_call.1} parent=31 // pred_check_branch
          %606 = sbr.rel (%p604) target = $region60
        $region59: #{tpu_custom_call.1} parent=31 // pred_region
          %607 = dma.done [#allocation5], 64
        $region60: #{tpu_custom_call.1} parent=31 // pred_fallthru
          _
      $region32: #{tpu_custom_call.1} parent=5 // pred_fallthru
        _
      %p608 = scmp.le.s32.totalorder 2, %s14
      // Predicated region
      $region61: #{tpu_custom_call.1} parent=5 // pred_check
        %p609 = pneg %p608
      $region62: #{tpu_custom_call.1} parent=5 // pred_check_branch
        %611 = sbr.rel (%p609) target = $region64
      $region63: #{tpu_custom_call.1} parent=5 // pred_region
        %s612 = ssub.s32 %s14, 2
      $region64: #{tpu_custom_call.1} parent=5 // pred_fallthru
        _
    $region6: #{tpu_custom_call.1} parent=1 // loop_footer
      %s18 = sadd.s32 1, %s14
    $region7: #{tpu_custom_call.1} parent=1 // loop_footer_branch
      %13 = sbr.rel target = $region3
    $region8: #{tpu_custom_call.1} parent=1 // loop_exit
      _
    %613 = vsyncpa [#allocation4], 1
    %s614 = scalar_lea.sflag [#allocation4], 1
    %615 = vsyncpa %s614, 1
    %616 = vsyncpa [#allocation7], 1
    %617 = vsyncpa [#allocation5], 1
    %s618 = scalar_lea.sflag [#allocation5], 1
    %619 = vsyncpa %s618, 1

</llo_original>
